<compile_context>
chip_gen: v6e
topology: v6e:2x2x1
jax: 0.10.0
libtpu: 0.0.40
codegen_flags: <defaults>
</compile_context>

<pallas_src>
import functools
import math

import jax
import jax.numpy as jnp
from jax.experimental import pallas as pl
from jax.experimental.pallas import tpu as pltpu

_LANE = 128
_SUBLANE = 8


def make_pe_table(max_len: int, dim: int) -> jnp.ndarray:
    """Deterministic sin/cos positional-encoding table, shape (max_len, dim), f32."""
    position = jnp.arange(max_len, dtype=jnp.float32)[:, None]               # (L, 1)
    div_term = jnp.exp(
        jnp.arange(0, dim, 2, dtype=jnp.float32) * -(math.log(10000.0) / dim)
    )                                                                         # (D/2,)
    ang = position * div_term                                                 # (L, D/2)
    pe = jnp.zeros((max_len, dim), dtype=jnp.float32)
    pe = pe.at[:, 0::2].set(jnp.sin(ang))
    pe = pe.at[:, 1::2].set(jnp.cos(ang))
    return pe


def _vmem_budget():
    """(per-buffer tile byte cap, scoped vmem_limit_bytes), per TPU generation."""
    try:
        phys = pltpu.get_tpu_info().vmem_capacity_bytes
    except Exception:
        phys = 64 * 1024 * 1024
    if phys <= 64 * 1024 * 1024:
        # v7x-class: 64 MiB physical per TC.  Worst case (training) has four
        # double-buffered streams (emb/pe/rand/out) -> 8 x 4 MiB = 32 MiB live.
        return 4 * 1024 * 1024, 44 * 1024 * 1024
    # v5e / v6e: 128 MiB physical -> larger tiles amortize the ~0.35 us/step cost.
    return 6 * 1024 * 1024, 64 * 1024 * 1024


def _pick_lane_width(total_minor: int, d: int, require_div_d: bool):
    """Widest lane count (multiple of 128) that tiles the flattened minor extent."""
    for c in (1024, 512, 256, 128):
        if total_minor % c == 0 and (not require_div_d or c % d == 0):
            return c
    return None


def _pick_row_tile(num_rows: int, row_cols: int, bytes_per_elem: int,
                   max_tile_bytes: int) -> int:
    """Largest row tile (multiple of 8, or full extent) under the per-buffer cap."""
    bytes_per_row = max(1, row_cols * bytes_per_elem)
    max_rows = max(1, max_tile_bytes // bytes_per_row)
    if max_rows >= num_rows:
        return num_rows
    return max(_SUBLANE, (max_rows // _SUBLANE) * _SUBLANE)


def _posenc_kernel(*refs, scale, drop_p, inv_keep, apply_dropout, broadcast_pe):
    # refs: (emb, pe[, rand], out) VMEM tiles.
    if apply_dropout:
        emb_ref, pe_ref, rand_ref, out_ref = refs
    else:
        emb_ref, pe_ref, out_ref = refs

    # torch: emb * sqrt(dim) stays in emb dtype; the add with the f32 pe buffer
    # then promotes to f32 (so bf16 inputs produce f32 like the reference).
    x = emb_ref[...] * jnp.asarray(scale, dtype=emb_ref.dtype)
    pe = pe_ref[...]
    if broadcast_pe:
        pe = jnp.broadcast_to(pe, x.shape)
    x = x + pe

    if apply_dropout:
        # Inverted dropout with a wrapper-generated uniform stream (portable:
        # no TPU-only PRNG primitives in the kernel body).
        keep = rand_ref[...] >= jnp.asarray(drop_p, dtype=rand_ref.dtype)
        x = jnp.where(keep, x * jnp.asarray(inv_keep, dtype=x.dtype),
                      jnp.zeros_like(x))

    out_ref[...] = x.astype(out_ref.dtype)


def positional_encoding(emb, pe_table, *, dim, dropout_p=0.0,
                        training=False, step=None, seed=0):
    """Pallas TPU implementation of PositionalEncoding.forward.

    emb:      (B, S, D) array.
    pe_table: (max_len, D) sin/cos table (kept float32, like the torch buffer).
    """
    B, S, D = emb.shape
    assert D == dim
    emb_dtype = emb.dtype
    pe_dtype = pe_table.dtype
    out_dtype = jnp.promote_types(emb_dtype, pe_dtype)   # torch promotion semantics

    # `if step:` intentionally mirrors PyTorch truthiness: step=None OR step=0
    # both take the pe[:S] slice path.
    if step:
        if isinstance(step, int) and step >= pe_table.shape[0]:
            raise IndexError(f"step {step} out of range for pe table "
                             f"of length {pe_table.shape[0]}")
        pe_row = pe_table[step][None, :]                  # (1, D)
        broadcast_pe = True
        # Step/decode path: collapse batch into the row axis (PE is a single
        # broadcast row, so this costs no extra HBM traffic) and present a
        # lane-dense view when D < 128 so stores are full-lane vst.
        C = None
        if D < _LANE and _LANE % D == 0:
            C = _pick_lane_width(B * S * D, D, require_div_d=True)
        if C is not None:
            R = (B * S * D) // C
            emb_view = emb.reshape(R, C)
            pe_view = jnp.tile(pe_row, (1, C // D))       # (1, C): C/D copies of the row
        else:
            R, C = B * S, D
            emb_view = emb.reshape(R, C)
            pe_view = pe_row
        batched = False
    else:
        pe_plane = pe_table[:S]                           # (S, D), float32
        broadcast_pe = False
        C = None
        if D < _LANE:
            C = _pick_lane_width(S * D, D, require_div_d=False)
        if C is not None:
            # emb and pe flatten (s, d) identically, so the add is preserved.
            R = (S * D) // C
            emb_view = emb.reshape(B, R, C)
            pe_view = pe_plane.reshape(R, C)
        else:
            R, C = S, D
            emb_view = emb
            pe_view = pe_plane
        batched = True

    max_tile_bytes, vmem_limit = _vmem_budget()
    itemsize = max(jnp.dtype(emb_dtype).itemsize, jnp.dtype(out_dtype).itemsize, 4)
    tr = _pick_row_tile(R, C, itemsize, max_tile_bytes)
    num_row_tiles = pl.cdiv(R, tr)

    # Keep >= 2 grid steps along a parallel axis when the row extent allows it,
    # so a 2-TensorCore chip (v7x) does not idle one core on a 1-step grid.
    total_steps = num_row_tiles * (B if batched else 1)
    if total_steps < 2 and R >= 2 * _SUBLANE and tr == R:
        half = pl.cdiv(R, 2)
        tr_try = max(_SUBLANE, ((half + _SUBLANE - 1) // _SUBLANE) * _SUBLANE)
        if tr_try < R:
            tr = tr_try
            num_row_tiles = pl.cdiv(R, tr)

    apply_dropout = bool(training) and float(dropout_p) > 0.0
    inv_keep = 1.0 / (1.0 - float(dropout_p)) if apply_dropout else 1.0

    kernel = functools.partial(
        _posenc_kernel,
        scale=math.sqrt(dim),
        drop_p=float(dropout_p),
        inv_keep=inv_keep,
        apply_dropout=apply_dropout,
        broadcast_pe=broadcast_pe,
    )

    inputs = [emb_view, pe_view]
    if batched:
        grid = (num_row_tiles, B)   # batch innermost: PE tile index constant -> no re-DMA
        dim_sem = ("parallel", "parallel")
        emb_spec = pl.BlockSpec((None, tr, C), lambda r, b: (b, r, 0))
        pe_spec = pl.BlockSpec((tr, C), lambda r, b: (r, 0))
        out_spec = pl.BlockSpec((None, tr, C), lambda r, b: (b, r, 0))
        rand_spec = pl.BlockSpec((None, tr, C), lambda r, b: (b, r, 0))
        out_struct = jax.ShapeDtypeStruct((B, R, C), out_dtype)
    else:
        grid = (num_row_tiles,)
        dim_sem = ("parallel",)
        emb_spec = pl.BlockSpec((tr, C), lambda r: (r, 0))
        pe_spec = pl.BlockSpec((1, C), lambda r: (0, 0))
        out_spec = pl.BlockSpec((tr, C), lambda r: (r, 0))
        rand_spec = pl.BlockSpec((tr, C), lambda r: (r, 0))
        out_struct = jax.ShapeDtypeStruct((R, C), out_dtype)

    in_specs = [emb_spec, pe_spec]
    if apply_dropout:
        # TODO(synk): training dropout cannot bit-match torch's RNG stream; the
        # uniform mask is generated with jax.random in the wrapper (deterministic
        # in (seed, B, S, D), independent of tiling / grid shape).
        rand = jax.random.uniform(jax.random.PRNGKey(seed),
                                  shape=emb_view.shape, dtype=jnp.float32)
        inputs.append(rand)
        in_specs.append(rand_spec)

    out = pl.pallas_call(
        kernel,
        out_shape=out_struct,
        grid=grid,
        in_specs=in_specs,
        out_specs=out_spec,
        compiler_params=pltpu.CompilerParams(
            dimension_semantics=dim_sem,
            vmem_limit_bytes=vmem_limit,
        ),
    )(*inputs)

    return out.reshape(B, S, D)


if __name__ == "__main__":
    # Small shapes consistent with the module: batch=2, seq=8, dim=32.
    B, S, D = 2, 8, 32
    MAX_LEN = 64
    DROPOUT_P = 0.1

    key = jax.random.PRNGKey(0)
    emb = jax.random.normal(key, (B, S, D), dtype=jnp.float32)
    pe_table = make_pe_table(MAX_LEN, D)

    # --- Eval mode, slice path (dropout is identity, exact match) ---
    out = positional_encoding(emb, pe_table, dim=D, dropout_p=DROPOUT_P,
                              training=False)
    out = jax.block_until_ready(out)
    ref = emb * math.sqrt(D) + pe_table[:S][None, :, :]
    assert out.shape == (B, S, D)
    assert jnp.allclose(out, ref, atol=1e-5, rtol=1e-5), "slice-path mismatch"

    # --- Eval mode, decode-style step path (single PE row broadcast) ---
    out_step = positional_encoding(emb, pe_table, dim=D, dropout_p=DROPOUT_P,
                                   training=False, step=3)
    out_step = jax.block_until_ready(out_step)
    ref_step = emb * math.sqrt(D) + pe_table[3][None, None, :]
    assert jnp.allclose(out_step, ref_step, atol=1e-5, rtol=1e-5), "step-path mismatch"

    # --- Training mode: inverted dropout (mask from jax.random, verified by invariant) ---
    out_tr = positional_encoding(emb, pe_table, dim=D, dropout_p=DROPOUT_P,
                                 training=True, seed=0)
    out_tr = jax.block_until_ready(out_tr)
    inv_keep = 1.0 / (1.0 - DROPOUT_P)
    kept_ref = ref * inv_keep
    ok = jnp.isclose(out_tr, kept_ref, atol=1e-4, rtol=1e-4) | (out_tr == 0.0)
    assert bool(jnp.all(ok)), "dropout-path mismatch"
    n_zero = int(jnp.sum(out_tr == 0.0))
    assert 0 < n_zero < out_tr.size, "dropout mask degenerate"

    print("KERNEL_OK")
</pallas_src>

<mosaic_0001>
module attributes {stable_mosaic.version = 11 : i64} {
  func.func @_posenc_kernel(%arg0: i32, %arg1: i32, %arg2: memref<1x1x256xf32, #tpu.memory_space<vmem>>, %arg3: memref<1x256xf32, #tpu.memory_space<vmem>>, %arg4: memref<1x1x256xf32, #tpu.memory_space<vmem>>) attributes {dimension_semantics = [#tpu.dimension_semantics<parallel>, #tpu.dimension_semantics<parallel>], iteration_bounds = array<i64: 1, 2>, scalar_prefetch = 0 : i64, scratch_operands = 0 : i64, tpu.core_type = #tpu.core_type<tc>, window_params = [{transform_indices = @transform_0, window_bounds = array<i64: 1, 1, 256>}, {transform_indices = @transform_1, window_bounds = array<i64: 1, 256>}, {transform_indices = @transform_2, window_bounds = array<i64: 1, 1, 256>}]} {
    %c0 = arith.constant 0 : index
    %c0_0 = arith.constant 0 : index
    %c0_1 = arith.constant 0 : index
    %0 = vector.load %arg2[%c0, %c0_0, %c0_1] : memref<1x1x256xf32, #tpu.memory_space<vmem>>, vector<1x1x256xf32>
    %1 = vector.shape_cast %0 : vector<1x1x256xf32> to vector<1x256xf32>
    %cst = arith.constant 5.65685415 : f32
    %2 = vector.broadcast %cst : f32 to vector<1x256xf32>
    %3 = arith.mulf %1, %2 : vector<1x256xf32>
    %c0_2 = arith.constant 0 : index
    %c0_3 = arith.constant 0 : index
    %4 = vector.load %arg3[%c0_2, %c0_3] : memref<1x256xf32, #tpu.memory_space<vmem>>, vector<1x256xf32>
    %5 = arith.addf %3, %4 : vector<1x256xf32>
    %c0_4 = arith.constant 0 : index
    %c0_5 = arith.constant 0 : index
    %c0_6 = arith.constant 0 : index
    %6 = vector.load %arg4[%c0_4, %c0_5, %c0_6] : memref<1x1x256xf32, #tpu.memory_space<vmem>>, vector<1x1x256xf32>
    %7 = vector.shape_cast %6 : vector<1x1x256xf32> to vector<1x256xf32>
    %8 = vector.shape_cast %5 : vector<1x256xf32> to vector<1x1x256xf32>
    tpu.vector_store %arg4[%c0_4, %c0_5, %c0_6], %8 {strides = array<i32>} : memref<1x1x256xf32, #tpu.memory_space<vmem>>, vector<1x1x256xf32>,
    return
  }
  func.func @transform_0(%arg0: i32, %arg1: i32) -> (i32, i32, i32) {
    %c0_i32 = arith.constant 0 : i32
    %c0_i32_0 = arith.constant 0 : i32
    return %arg1, %arg0, %c0_i32 : i32, i32, i32
  }
  func.func @transform_1(%arg0: i32, %arg1: i32) -> (i32, i32) {
    %c0_i32 = arith.constant 0 : i32
    %c0_i32_0 = arith.constant 0 : i32
    return %arg0, %c0_i32 : i32, i32
  }
  func.func @transform_2(%arg0: i32, %arg1: i32) -> (i32, i32, i32) {
    %c0_i32 = arith.constant 0 : i32
    %c0_i32_0 = arith.constant 0 : i32
    return %arg1, %arg0, %c0_i32 : i32, i32, i32
  }
}

</mosaic_0001>

<llo_original>
// kernel: tpu_custom_call.1
$region0: #{tpu_custom_call.1}
  #allocation0 [shape = 'u32[]', space=smem, size = 0x4, offset = 0x4, fixed_abs, tag = 'smem constant byte address 0x4 - core index']
  #allocation1 [shape = 'u32[144,128]{1,0:T(1,128)}', space=vmem, size = 0x12000, scoped, tag = 'internal scratch']
  %s0 = inlined_call_operand.hbm [shape: f32[2,1,256], index: 0, kind: input, shape index: {}]
  %s1 = inlined_call_operand.hbm [shape: f32[1,256], index: 1, kind: input, shape index: {}]
  %s2 = inlined_call_operand.hbm [shape: f32[2,1,256], index: 2, kind: output, shape index: {}]
  %s3 = sld [smem:[#allocation0]]
  $region49: #{tpu_custom_call.1} parent=0
    _
  %s5 = ssub.s32 1, %s3
  %s6 = scalar_select 0, %s5, %s3
  $region1: #{tpu_custom_call.1} parent=0
    #allocation2 [shape = 'u8[2048]{0}', space=vmem, size = 0x800, scoped, tag = 'input window, operand 0']
    #allocation3 [shape = 's32[2]{0}', space=sflag, size = 0x8, scoped, tag = 'scoped memory for tpu_custom_call.1']
    #allocation4 [shape = 's32[2]{0}', space=sflag, size = 0x8, scoped, tag = 'scoped memory for tpu_custom_call.1']
    #allocation5 [shape = 'u8[1024]{0}', space=vmem, size = 0x400, scoped, tag = 'input window, operand 1, single buffered']
    #allocation6 [shape = 's32[1]{0}', space=sflag, size = 0x4, scoped, tag = 'scoped memory for tpu_custom_call.1']
    #allocation7 [shape = 'u8[2048]{0}', space=vmem, size = 0x800, scoped, tag = 'output window, operand 0']
    %7 = vsyncpa [#allocation3], 0
    %s8 = scalar_lea.sflag [#allocation3], 1
    %9 = vsyncpa %s8, 0
    %10 = vsyncpa [#allocation6], 0
    %11 = vsyncpa [#allocation4], 0
    %s12 = scalar_lea.sflag [#allocation4], 1
    %13 = vsyncpa %s12, 0
    loop: start=0, step=1, limit=4
    $region2: #{tpu_custom_call.1} parent=1 // loop_pre_header
      _
    $region3: #{tpu_custom_call.1} parent=1 // loop_header
      %s15 = sphi 0, %s19
      %p16 = scmp.ge.s32.totalorder %s15, 4
      %s22 = sphi 0, %s34
      %s23 = sphi 0, %s30
      %s24 = sphi 0, %s22
      %s25 = sphi 0, %s23
      %s26 = sphi 0, %s24
      %s27 = sphi 0, %s25
      %s39 = sphi 0, %s41
      %s42 = sphi 0, %s39
      %s43 = sphi 0, %s42
      %s59 = sphi 0, %s43
      %s65 = sphi 0, %s67
      %s68 = sphi 0, %s65
      %s69 = sphi 0, %s68
      %s85 = sphi 0, %s69
      %s93 = sphi 0, %s95
      %s96 = sphi 0, %s93
      %s97 = sphi 0, %s96
      %s113 = sphi 0, %s97
    $region4: #{tpu_custom_call.1} parent=1 // loop_header_branch
      %18 = sbr.rel (%p16) target = $region8
    $region5: #{tpu_custom_call.1} parent=1 // loop_body
      %s20 = ssub.s32 %s15, 1
      %s21 = ssub.s32 %s15, 2
      %s28 = sadd.s32 1, %s23
      %p29 = scmp.ge.s32.totalorder %s28, 2
      %s30 = scalar_select %p29, 0, %s28
      %s31 = sadd.s32 1, %s22
      %s32 = scalar_select %p29, %s31, %s22
      %p33 = scmp.ge.s32.totalorder %s32, 1
      %s34 = scalar_select %p33, 0, %s32
      %s35 = ssub.s32 %s23, %s30
      %s36 = ssub.s32 %s22, %s34
      %s37 = sor.u32 %s35, %s36
      %p38 = scmp.eq.s32.totalorder %s37, 0
      %s40 = sadd.s32 %s39, 1
      %s41 = scalar_select %p38, %s39, %s40
      %p44 = pneg %p38
      %p45 = scmp.eq.s32.totalorder %s15, 1
      %p46 = por %p44, %p45
      %p47 = scmp.ne.s32.totalorder %s39, %s42
      %p48 = scmp.eq.s32.totalorder %s15, 0
      %p49 = por %p47, %p48
      %p50 = scmp.ne.s32.totalorder %s39, %s42
      %p51 = scmp.eq.s32.totalorder %s20, 1
      %p52 = por %p50, %p51
      %p53 = scmp.ne.s32.totalorder %s42, %s43
      %p54 = scmp.eq.s32.totalorder %s20, 0
      %p55 = por %p53, %p54
      %p56 = scmp.ne.s32.totalorder %s42, %s43
      %p57 = scmp.eq.s32.totalorder %s21, 1
      %p58 = por %p56, %p57
      %p60 = scmp.ne.s32.totalorder %s43, %s59
      %p61 = scmp.eq.s32.totalorder %s21, 0
      %p62 = por %p60, %p61
      %s63 = ssub.s32 %s22, %s34
      %p64 = scmp.eq.s32.totalorder %s63, 0
      %s66 = sadd.s32 %s65, 1
      %s67 = scalar_select %p64, %s65, %s66
      %p70 = pneg %p64
      %p71 = scmp.eq.s32.totalorder %s15, 1
      %p72 = por %p70, %p71
      %p73 = scmp.ne.s32.totalorder %s65, %s68
      %p74 = scmp.eq.s32.totalorder %s15, 0
      %p75 = por %p73, %p74
      %p76 = scmp.ne.s32.totalorder %s65, %s68
      %p77 = scmp.eq.s32.totalorder %s20, 1
      %p78 = por %p76, %p77
      %p79 = scmp.ne.s32.totalorder %s68, %s69
      %p80 = scmp.eq.s32.totalorder %s20, 0
      %p81 = por %p79, %p80
      %p82 = scmp.ne.s32.totalorder %s68, %s69
      %p83 = scmp.eq.s32.totalorder %s21, 1
      %p84 = por %p82, %p83
      %p86 = scmp.ne.s32.totalorder %s69, %s85
      %p87 = scmp.eq.s32.totalorder %s21, 0
      %p88 = por %p86, %p87
      %s89 = ssub.s32 %s23, %s30
      %s90 = ssub.s32 %s22, %s34
      %s91 = sor.u32 %s89, %s90
      %p92 = scmp.eq.s32.totalorder %s91, 0
      %s94 = sadd.s32 %s93, 1
      %s95 = scalar_select %p92, %s93, %s94
      %p98 = pneg %p92
      %p99 = scmp.eq.s32.totalorder %s15, 1
      %p100 = por %p98, %p99
      %p101 = scmp.ne.s32.totalorder %s93, %s96
      %p102 = scmp.eq.s32.totalorder %s15, 0
      %p103 = por %p101, %p102
      %p104 = scmp.ne.s32.totalorder %s93, %s96
      %p105 = scmp.eq.s32.totalorder %s20, 1
      %p106 = por %p104, %p105
      %p107 = scmp.ne.s32.totalorder %s96, %s97
      %p108 = scmp.eq.s32.totalorder %s20, 0
      %p109 = por %p107, %p108
      %p110 = scmp.ne.s32.totalorder %s96, %s97
      %p111 = scmp.eq.s32.totalorder %s21, 1
      %p112 = por %p110, %p111
      %p114 = scmp.ne.s32.totalorder %s97, %s113
      %p115 = scmp.eq.s32.totalorder %s21, 0
      %p116 = por %p114, %p115
      %p117 = scmp.le.s32.totalorder 1, %s15
      %p118 = scmp.lt.s32.totalorder %s15, 3
      %p119 = pnand %p117, %p118
      %p120 = pneg %p119
      // Predicated region
      $region9: #{tpu_custom_call.1} parent=5 // pred_check
        _
      $region10: #{tpu_custom_call.1} parent=5 // pred_check_branch
        %122 = sbr.rel (%p119) target = $region12
      $region11: #{tpu_custom_call.1} parent=5 // pred_region
        %s123 = ssub.s32 %s15, 1
        // Predicated region
        $region13: #{tpu_custom_call.1} parent=11 // pred_check
          %p124 = pneg %p81
        $region14: #{tpu_custom_call.1} parent=11 // pred_check_branch
          %126 = sbr.rel (%p124) target = $region16
        $region15: #{tpu_custom_call.1} parent=11 // pred_region
          %s128 = ssub.s32 32, 32
          %129 = vsyncadd [#allocation6], %s128
          %s130 = smul.addr %s24, 2
          %s131 = smul.addr %s130, 16
          %s132 = scalar_lea.hbm %s1, %s131
          %s134 = sshll.u32 [#allocation5], 4
          %s135 = int_to_ptr.vmem [resolvable:$true] %s134
          %137 = dma.hbm_to_vmem [thread:$0]  %s132, 32, %s135, [#allocation6]
        $region16: #{tpu_custom_call.1} parent=11 // pred_fallthru
          _
      $region12: #{tpu_custom_call.1} parent=5 // pred_fallthru
        _
      %p138 = scmp.lt.s32.totalorder %s15, 2
      // Predicated region
      $region17: #{tpu_custom_call.1} parent=5 // pred_check
        %p139 = pneg %p138
      $region18: #{tpu_custom_call.1} parent=5 // pred_check_branch
        %141 = sbr.rel (%p139) target = $region20
      $region19: #{tpu_custom_call.1} parent=5 // pred_region
        // Predicated region
        $region21: #{tpu_custom_call.1} parent=19 // pred_check
          %p142 = pneg %p49
        $region22: #{tpu_custom_call.1} parent=19 // pred_check_branch
          %144 = sbr.rel (%p142) target = $region24
        $region23: #{tpu_custom_call.1} parent=19 // pred_region
          %s145 = sand.u32 %s39, 1
          %s146 = scalar_lea.sflag [#allocation3], %s145
          %s147 = sand.u32 %s39, 1
          %s148 = smul.addr %s147, 2
          %s149 = scalar_lea.vmem [#allocation2], %s148
          %s151 = ssub.s32 32, 32
          %152 = vsyncadd %s146, %s151
          %s153 = smul.addr %s22, 2
          %s154 = smul.addr %s23, 2
          %s155 = sadd.s32 %s153, %s154
          %s156 = smul.addr %s155, 16
          %s157 = scalar_lea.hbm %s0, %s156
          %s159 = sshll.u32 %s149, 4
          %s160 = int_to_ptr.vmem [resolvable:$true] %s159
          %162 = dma.hbm_to_vmem [thread:$0]  %s157, 32, %s160, %s146
        $region24: #{tpu_custom_call.1} parent=19 // pred_fallthru
          _
      $region20: #{tpu_custom_call.1} parent=5 // pred_fallthru
        _
      %p163 = scmp.le.s32.totalorder 1, %s15
      %p164 = scmp.lt.s32.totalorder %s15, 3
      %p165 = pnand %p163, %p164
      %p166 = pneg %p165
      // Predicated region
      $region25: #{tpu_custom_call.1} parent=5 // pred_check
        _
      $region26: #{tpu_custom_call.1} parent=5 // pred_check_branch
        %168 = sbr.rel (%p165) target = $region28
      $region27: #{tpu_custom_call.1} parent=5 // pred_region
        %s169 = ssub.s32 %s15, 1
        %s170 = sand.u32 %s42, 1
        %s171 = scalar_lea.sflag [#allocation3], %s170
        %s172 = sand.u32 %s42, 1
        %s173 = smul.addr %s172, 2
        %s174 = scalar_lea.vmem [#allocation2], %s173
        // Predicated region
        $region29: #{tpu_custom_call.1} parent=27 // pred_check
          %p175 = pneg %p55
        $region30: #{tpu_custom_call.1} parent=27 // pred_check_branch
          %177 = sbr.rel (%p175) target = $region32
        $region31: #{tpu_custom_call.1} parent=27 // pred_region
          %178 = dma.done %s171, 32
        $region32: #{tpu_custom_call.1} parent=27 // pred_fallthru
          _
        // Predicated region
        $region33: #{tpu_custom_call.1} parent=27 // pred_check
          %p179 = pneg %p81
        $region34: #{tpu_custom_call.1} parent=27 // pred_check_branch
          %181 = sbr.rel (%p179) target = $region36
        $region35: #{tpu_custom_call.1} parent=27 // pred_region
          %182 = dma.done [#allocation6], 32
        $region36: #{tpu_custom_call.1} parent=27 // pred_fallthru
          _
        %s183 = sand.u32 %s42, 1
        %s184 = scalar_lea.sflag [#allocation3], %s183
        %s185 = sand.u32 %s42, 1
        %s186 = smul.addr %s185, 2
        %s187 = scalar_lea.vmem [#allocation2], %s186
        %p188 = pneg %p55
        %p189 = pneg %p52
        %p190 = pneg %p81
        %p191 = pneg %p78
        %p192 = pneg %p109
        %p193 = pneg %p106
        %s194 = sand.u32 %s96, 1
        %s195 = scalar_lea.sflag [#allocation4], %s194
        %s196 = sand.u32 %s96, 1
        %s197 = smul.addr %s196, 2
        %s198 = scalar_lea.vmem [#allocation7], %s197
        %v199 = vld [vmem:[%s174] sm:$0x3]
        %v200 = vmul.f32 %v199, 5.656854
        %v201 = vld [vmem:[#allocation5] sm:$0x3]
        %v202 = vadd.f32 %v200, %v201
        %v203 = vlaneseq
        %vm204 = vcmp.ge.s32.totalorder %v203, 0
        %vm205 = vcmp.lt.s32.totalorder %v203, 256
        %vm206 = vmand %vm204, %vm205
        %207 = vst.msk [vmem:[%s198] sm:$0x3] %vm206, %v202
        %s208 = sand.u32 %s96, 1
        %s209 = scalar_lea.sflag [#allocation4], %s208
        %s210 = sand.u32 %s96, 1
        %s211 = smul.addr %s210, 2
        %s212 = scalar_lea.vmem [#allocation7], %s211
        // Predicated region
        $region37: #{tpu_custom_call.1} parent=27 // pred_check
          %p213 = pneg %p106
        $region38: #{tpu_custom_call.1} parent=27 // pred_check_branch
          %215 = sbr.rel (%p213) target = $region40
        $region39: #{tpu_custom_call.1} parent=27 // pred_region
          %s217 = ssub.s32 32, 32
          %218 = vsyncadd %s209, %s217
          %s219 = smul.addr %s24, 2
          %s220 = smul.addr %s25, 2
          %s221 = sadd.s32 %s219, %s220
          %s222 = smul.addr %s221, 16
          %s223 = scalar_lea.hbm %s2, %s222
          %s225 = sshll.u32 %s212, 4
          %s226 = int_to_ptr.vmem [resolvable:$true] %s225
          %228 = dma.vmem_to_hbm [thread:$0]  %s226, 32, %s223, %s209
        $region40: #{tpu_custom_call.1} parent=27 // pred_fallthru
          _
      $region28: #{tpu_custom_call.1} parent=5 // pred_fallthru
        _
      %p229 = scmp.le.s32.totalorder 2, %s15
      // Predicated region
      $region41: #{tpu_custom_call.1} parent=5 // pred_check
        %p230 = pneg %p229
      $region42: #{tpu_custom_call.1} parent=5 // pred_check_branch
        %232 = sbr.rel (%p230) target = $region44
      $region43: #{tpu_custom_call.1} parent=5 // pred_region
        %s233 = ssub.s32 %s15, 2
        // Predicated region
        $region45: #{tpu_custom_call.1} parent=43 // pred_check
          %p234 = pneg %p112
        $region46: #{tpu_custom_call.1} parent=43 // pred_check_branch
          %236 = sbr.rel (%p234) target = $region48
        $region47: #{tpu_custom_call.1} parent=43 // pred_region
          %s237 = sand.u32 %s97, 1
          %s238 = scalar_lea.sflag [#allocation4], %s237
          %s239 = sand.u32 %s97, 1
          %s240 = smul.addr %s239, 2
          %s241 = scalar_lea.vmem [#allocation7], %s240
          %242 = dma.done %s238, 32
        $region48: #{tpu_custom_call.1} parent=43 // pred_fallthru
          _
      $region44: #{tpu_custom_call.1} parent=5 // pred_fallthru
        _
    $region6: #{tpu_custom_call.1} parent=1 // loop_footer
      %s19 = sadd.s32 1, %s15
    $region7: #{tpu_custom_call.1} parent=1 // loop_footer_branch
      %14 = sbr.rel target = $region3
    $region8: #{tpu_custom_call.1} parent=1 // loop_exit
      _
    %243 = vsyncpa [#allocation3], 1
    %s244 = scalar_lea.sflag [#allocation3], 1
    %245 = vsyncpa %s244, 1
    %246 = vsyncpa [#allocation6], 1
    %247 = vsyncpa [#allocation4], 1
    %s248 = scalar_lea.sflag [#allocation4], 1
    %249 = vsyncpa %s248, 1

</llo_original>
